<compile_context>
chip_gen: v7x
topology: tpu7x:2x2x1
jax: 0.10.0
libtpu: 0.0.40
codegen_flags: <defaults>
</compile_context>

<pallas_src>
import math
import jax
import jax.numpy as jnp
from jax.experimental import pallas as pl
from jax.experimental.pallas import tpu as pltpu

BN_EPS = 1e-5


def _round_up(x, m):
    return ((x + m - 1) // m) * m


def _pick_tile(n, candidates):
    for c in candidates:
        if c <= n and n % c == 0:
            return c
    return n


# ---------------------------------------------------------------------------
# Kernels
# ---------------------------------------------------------------------------
def support_kernel(x_ref, wcat_ref, sup_ref, selfp_ref):
    # sc = x @ [W | W_self] : one lane-dense matmul shared by both terms.
    sc = jnp.dot(x_ref[...], wcat_ref[...], preferred_element_type=jnp.float32)
    hp = sup_ref.shape[-1]
    sup_ref[...] = sc[:, :hp].astype(sup_ref.dtype)   # support (bf16), RHS of adj matmul
    selfp_ref[...] = sc[:, hp:]                        # self-loop term (f32)


def aggregate_kernel(adj_ref, sup_ref, selfp_ref, z_ref, acc_ref):
    k = pl.program_id(1)

    @pl.when(k == 0)
    def _():
        acc_ref[...] = selfp_ref[...]          # init accumulator with self-loop term

    acc_ref[...] += jnp.dot(adj_ref[...], sup_ref[...],
                            preferred_element_type=jnp.float32)

    @pl.when(k == pl.num_programs(1) - 1)
    def _():
        z_ref[...] = acc_ref[...]


def stats_kernel(z_ref, sum_ref, sq_ref):
    # Resident (1, Hp) accumulators across the row-tile grid (two-phase BatchNorm).
    @pl.when(pl.program_id(0) == 0)
    def _():
        sum_ref[...] = jnp.zeros_like(sum_ref)
        sq_ref[...] = jnp.zeros_like(sq_ref)

    z = z_ref[...]
    sum_ref[...] += jnp.sum(z, axis=0, keepdims=True)
    sq_ref[...] += jnp.sum(z * z, axis=0, keepdims=True)


def bn_relu_kernel(z_ref, scale_ref, shift_ref, mask_ref, o_ref):
    out = z_ref[...] * scale_ref[...] + shift_ref[...]
    o_ref[...] = (jnp.maximum(out, 0.0) * mask_ref[...]).astype(o_ref.dtype)


# ---------------------------------------------------------------------------
# pallas_call wrappers
# ---------------------------------------------------------------------------
def _support_call(x_bf16, wcat_bf16, hp):
    n_pad, fp = x_bf16.shape
    two_hp = wcat_bf16.shape[1]
    ts = _pick_tile(n_pad, (512, 256, 128))
    return pl.pallas_call(
        support_kernel,
        grid=(n_pad // ts,),
        in_specs=[
            pl.BlockSpec((ts, fp), lambda i: (i, 0)),
            pl.BlockSpec((fp, two_hp), lambda i: (0, 0)),
        ],
        out_specs=[
            pl.BlockSpec((ts, hp), lambda i: (i, 0)),
            pl.BlockSpec((ts, hp), lambda i: (i, 0)),
        ],
        out_shape=(
            jax.ShapeDtypeStruct((n_pad, hp), jnp.bfloat16),
            jax.ShapeDtypeStruct((n_pad, hp), jnp.float32),
        ),
        compiler_params=pltpu.CompilerParams(dimension_semantics=("parallel",)),
    )(x_bf16, wcat_bf16)


def _aggregate_call(adj_bf16, sup_bf16, selfp_f32):
    n_pad = adj_bf16.shape[0]
    hp = sup_bf16.shape[1]
    tm = _pick_tile(n_pad, (256, 128))          # row tile (parallel across TCs)
    tk = _pick_tile(n_pad, (512, 256, 128))     # adj-column reduction tile
    return pl.pallas_call(
        aggregate_kernel,
        grid=(n_pad // tm, n_pad // tk),
        in_specs=[
            pl.BlockSpec((tm, tk), lambda i, k: (i, k)),   # adj tile (streamed, bf16)
            pl.BlockSpec((tk, hp), lambda i, k: (k, 0)),   # support tile (bf16)
            pl.BlockSpec((tm, hp), lambda i, k: (i, 0)),   # self-loop term (f32)
        ],
        out_specs=pl.BlockSpec((tm, hp), lambda i, k: (i, 0)),
        out_shape=jax.ShapeDtypeStruct((n_pad, hp), jnp.float32),
        scratch_shapes=[pltpu.VMEM((tm, hp), jnp.float32)],
        compiler_params=pltpu.CompilerParams(
            dimension_semantics=("parallel", "arbitrary")),
    )(adj_bf16, sup_bf16, selfp_f32)


def _stats_call(z):
    n_pad, hp = z.shape
    tr = _pick_tile(n_pad, (512, 256, 128))
    return pl.pallas_call(
        stats_kernel,
        grid=(n_pad // tr,),
        in_specs=[pl.BlockSpec((tr, hp), lambda i: (i, 0))],
        out_specs=[
            pl.BlockSpec((1, hp), lambda i: (0, 0)),
            pl.BlockSpec((1, hp), lambda i: (0, 0)),
        ],
        out_shape=(
            jax.ShapeDtypeStruct((1, hp), jnp.float32),
            jax.ShapeDtypeStruct((1, hp), jnp.float32),
        ),
        compiler_params=pltpu.CompilerParams(dimension_semantics=("arbitrary",)),
    )(z)


def _bn_relu_call(z, scale, shift, row_mask):
    n_pad, hp = z.shape
    tr = _pick_tile(n_pad, (512, 256, 128))
    return pl.pallas_call(
        bn_relu_kernel,
        grid=(n_pad // tr,),
        in_specs=[
            pl.BlockSpec((tr, hp), lambda i: (i, 0)),
            pl.BlockSpec((1, hp), lambda i: (0, 0)),
            pl.BlockSpec((1, hp), lambda i: (0, 0)),
            pl.BlockSpec((tr, 1), lambda i: (i, 0)),
        ],
        out_specs=pl.BlockSpec((tr, hp), lambda i: (i, 0)),
        out_shape=jax.ShapeDtypeStruct((n_pad, hp), jnp.float32),
        compiler_params=pltpu.CompilerParams(dimension_semantics=("parallel",)),
    )(z, scale, shift, row_mask)


# ---------------------------------------------------------------------------
# One GraphConvolutionBS layer on padded tensors
# ---------------------------------------------------------------------------
def gcn_layer_padded(x_pad, adj_bf16, weight, self_weight, gamma, beta, n_real, row_mask):
    """x_pad [Np,Fp] f32 (padded rows/cols zero), adj_bf16 [Np,Np] (padded zero).
    weight/self_weight [fin,hidden], gamma/beta [hidden] (unpadded).
    Returns padded [Np,Hp] f32 output with padded rows / feature columns zero."""
    _, fp = x_pad.shape
    fin, hidden = weight.shape
    hp = _round_up(hidden, 128)

    # Fused weight [W | W_self] padded to [Fp, 2*Hp] -> single lane-dense matmul.
    wcat = jnp.zeros((fp, 2 * hp), jnp.float32)
    wcat = wcat.at[:fin, :hidden].set(weight)
    wcat = wcat.at[:fin, hp:hp + hidden].set(self_weight)
    wcat_bf16 = wcat.astype(jnp.bfloat16)

    # (1) support + self-loop terms
    sup_bf16, selfp = _support_call(x_pad.astype(jnp.bfloat16), wcat_bf16, hp)

    # (2) z = adj @ support + selfpart (tiled k-reduction with VMEM accumulator)
    z = _aggregate_call(adj_bf16, sup_bf16, selfp)

    # NOTE: the reference adds a zero-initialized bias here; added before
    # BatchNorm's mean subtraction it cancels exactly, so it is folded away.

    # (3) BatchNorm batch statistics (training-mode forward, biased variance)
    s, sq = _stats_call(z)
    n = jnp.float32(n_real)
    mean = s / n
    var = jnp.maximum(sq / n - mean * mean, 0.0)
    inv = jax.lax.rsqrt(var + BN_EPS)
    gamma_pad = jnp.zeros((1, hp), jnp.float32).at[0, :hidden].set(gamma)
    beta_pad = jnp.zeros((1, hp), jnp.float32).at[0, :hidden].set(beta)
    scale = gamma_pad * inv
    shift = beta_pad - mean * scale

    # (4) normalize + affine + ReLU; padded rows re-zeroed via row_mask
    return _bn_relu_call(z, scale, shift, row_mask)


# ---------------------------------------------------------------------------
# GraphBaseBlock: parameter init + forward
# ---------------------------------------------------------------------------
def glorot_init(key, shape):
    fan_in, fan_out = shape[-2], shape[-1]
    stdv = math.sqrt(6.0 / (fan_in + fan_out))
    return jax.random.uniform(key, shape, jnp.float32, -stdv, stdv)


def init_graph_base_block(key, in_features, hidden, nbaselayer):
    params = []
    for i in range(nbaselayer):
        fin = in_features if i == 0 else hidden
        key, k1, k2 = jax.random.split(key, 3)
        params.append(dict(
            weight=glorot_init(k1, (fin, hidden)),
            self_weight=glorot_init(k2, (fin, hidden)),
            gamma=jnp.ones((hidden,), jnp.float32),   # BatchNorm1d weight
            beta=jnp.zeros((hidden,), jnp.float32),   # BatchNorm1d bias
        ))
    return params


def graph_base_block_forward(params, x_in, adj, aggrmethod="concat", dense=False):
    def doconcat(a, b):
        if a is None:
            return b
        if aggrmethod == "concat":
            return jnp.concatenate((a, b), axis=1)
        if aggrmethod == "add":
            return a + b
        if aggrmethod == "nores":
            return a
        raise NotImplementedError(aggrmethod)

    n, fin0 = x_in.shape
    hidden = params[0]["weight"].shape[1]
    n_pad = _round_up(n, 128)
    fp0 = _round_up(fin0, 128)

    # Pad once; padded rows/cols are zero so they never leak into the real output.
    adj_bf16 = jnp.zeros((n_pad, n_pad), jnp.float32).at[:n, :n].set(adj).astype(jnp.bfloat16)
    row_mask = jnp.zeros((n_pad, 1), jnp.float32).at[:n, :].set(1.0)
    x_pad = jnp.zeros((n_pad, fp0), jnp.float32).at[:n, :fin0].set(x_in)

    x_unp = x_in
    denseout = None
    for p in params:
        denseout = doconcat(denseout, x_unp)
        out_pad = gcn_layer_padded(x_pad, adj_bf16, p["weight"], p["self_weight"],
                                   p["gamma"], p["beta"], n, row_mask)
        # TODO(synk): F.dropout is stochastic at train time; identity here
        # (inference-mode forward) for deterministic kernel semantics.
        x_pad = out_pad
        x_unp = out_pad[:n, :hidden]

    if not dense:
        return doconcat(x_unp, x_in)
    return doconcat(x_unp, denseout)


# ---------------------------------------------------------------------------
# Pure-JAX f32 reference (mirrors the PyTorch forward) for validation
# ---------------------------------------------------------------------------
def reference_forward(params, x_in, adj, aggrmethod="concat", dense=False):
    def doconcat(a, b):
        if a is None:
            return b
        if aggrmethod == "concat":
            return jnp.concatenate((a, b), axis=1)
        if aggrmethod == "add":
            return a + b
        if aggrmethod == "nores":
            return a
        raise NotImplementedError(aggrmethod)

    x = x_in
    denseout = None
    for p in params:
        denseout = doconcat(denseout, x)
        out = adj @ (x @ p["weight"]) + x @ p["self_weight"]
        mean = out.mean(0, keepdims=True)
        var = jnp.mean((out - mean) ** 2, axis=0, keepdims=True)
        out = (out - mean) * jax.lax.rsqrt(var + BN_EPS)
        out = out * p["gamma"][None, :] + p["beta"][None, :]
        x = jnp.maximum(out, 0.0)
    if not dense:
        return doconcat(x, x_in)
    return doconcat(x, denseout)


# ---------------------------------------------------------------------------
if __name__ == "__main__":
    key = jax.random.PRNGKey(0)

    N = 16            # number of graph nodes
    IN_FEATURES = 8
    HIDDEN = 32
    NBASELAYER = 2

    kx, kadj, kparams = jax.random.split(key, 3)

    # node features [N, IN_FEATURES]
    x = jax.random.normal(kx, (N, IN_FEATURES), jnp.float32)

    # symmetric row-normalized adjacency with self loops [N, N]
    a = jax.random.uniform(kadj, (N, N), jnp.float32)
    a = (a + a.T) * 0.5 + jnp.eye(N, dtype=jnp.float32)
    adj = a / jnp.sum(a, axis=1, keepdims=True)

    params = init_graph_base_block(kparams, IN_FEATURES, HIDDEN, NBASELAYER)

    out = graph_base_block_forward(params, x, adj, aggrmethod="concat", dense=False)
    out = jax.block_until_ready(out)

    # aggrmethod='concat', dense=False -> out_features = hidden + in_features
    assert out.shape == (N, HIDDEN + IN_FEATURES), out.shape
    assert out.dtype == jnp.float32
    assert bool(jnp.all(jnp.isfinite(out)))

    ref = reference_forward(params, x, adj, aggrmethod="concat", dense=False)
    max_err = float(jnp.max(jnp.abs(out - ref)))
    assert max_err < 1e-1, f"max abs error vs f32 reference: {max_err}"

    print("KERNEL_OK")
</pallas_src>

<mosaic_0001>
module attributes {stable_mosaic.version = 11 : i64} {
  func.func @support_kernel(%arg0: i32, %arg1: memref<128x128xbf16, #tpu.memory_space<vmem>>, %arg2: memref<128x256xbf16, #tpu.memory_space<vmem>>, %arg3: memref<128x128xbf16, #tpu.memory_space<vmem>>, %arg4: memref<128x128xf32, #tpu.memory_space<vmem>>) attributes {dimension_semantics = [#tpu.dimension_semantics<parallel>], iteration_bounds = array<i64: 1>, scalar_prefetch = 0 : i64, scratch_operands = 0 : i64, tpu.core_type = #tpu.core_type<tc>, window_params = [{transform_indices = @transform_0, window_bounds = array<i64: 128, 128>}, {pipeline_mode = #tpu.pipeline_mode<synchronous>, transform_indices = @transform_1, window_bounds = array<i64: 128, 256>}, {transform_indices = @transform_2, window_bounds = array<i64: 128, 128>}, {transform_indices = @transform_3, window_bounds = array<i64: 128, 128>}]} {
    %c0 = arith.constant 0 : index
    %c0_0 = arith.constant 0 : index
    %0 = vector.load %arg1[%c0, %c0_0] : memref<128x128xbf16, #tpu.memory_space<vmem>>, vector<128x128xbf16>
    %c0_1 = arith.constant 0 : index
    %c0_2 = arith.constant 0 : index
    %1 = vector.load %arg2[%c0_1, %c0_2] : memref<128x256xbf16, #tpu.memory_space<vmem>>, vector<128x256xbf16>
    %cst = arith.constant dense<0.000000e+00> : vector<128x256xf32>
    %2 = tpu.matmul %0, %1, %cst {dimension_numbers = #tpu.dot_dimension_numbers<[1], [0], [0], [1], [0, 0, 1, 1], [], []>} : vector<128x128xbf16>, vector<128x256xbf16>, vector<128x256xf32> -> vector<128x256xf32>
    %3 = vector.extract_strided_slice %2 {offsets = [0, 0], sizes = [128, 128], strides = [1, 1]} : vector<128x256xf32> to vector<128x128xf32>
    %4 = arith.truncf %3 : vector<128x128xf32> to vector<128x128xbf16>
    %c0_3 = arith.constant 0 : index
    %c0_4 = arith.constant 0 : index
    %5 = vector.load %arg3[%c0_3, %c0_4] : memref<128x128xbf16, #tpu.memory_space<vmem>>, vector<128x128xbf16>
    tpu.vector_store %arg3[%c0_3, %c0_4], %4 {strides = array<i32>} : memref<128x128xbf16, #tpu.memory_space<vmem>>, vector<128x128xbf16>,
    %6 = vector.extract_strided_slice %2 {offsets = [0, 128], sizes = [128, 128], strides = [1, 1]} : vector<128x256xf32> to vector<128x128xf32>
    %c0_5 = arith.constant 0 : index
    %c0_6 = arith.constant 0 : index
    %7 = vector.load %arg4[%c0_5, %c0_6] : memref<128x128xf32, #tpu.memory_space<vmem>>, vector<128x128xf32>
    tpu.vector_store %arg4[%c0_5, %c0_6], %6 {strides = array<i32>} : memref<128x128xf32, #tpu.memory_space<vmem>>, vector<128x128xf32>,
    return
  }
  func.func @transform_0(%arg0: i32) -> (i32, i32) {
    %c0_i32 = arith.constant 0 : i32
    %c0_i32_0 = arith.constant 0 : i32
    return %arg0, %c0_i32 : i32, i32
  }
  func.func @transform_1(%arg0: i32) -> (i32, i32) {
    %c0_i32 = arith.constant 0 : i32
    %c0_i32_0 = arith.constant 0 : i32
    %c0_i32_1 = arith.constant 0 : i32
    return %c0_i32, %c0_i32_0 : i32, i32
  }
  func.func @transform_2(%arg0: i32) -> (i32, i32) {
    %c0_i32 = arith.constant 0 : i32
    %c0_i32_0 = arith.constant 0 : i32
    return %arg0, %c0_i32 : i32, i32
  }
  func.func @transform_3(%arg0: i32) -> (i32, i32) {
    %c0_i32 = arith.constant 0 : i32
    %c0_i32_0 = arith.constant 0 : i32
    return %arg0, %c0_i32 : i32, i32
  }
}

</mosaic_0001>

<llo_original>
// kernel: tpu_custom_call.1
$region0: #{tpu_custom_call.1}
  #allocation0 [shape = 'u32[]', space=smem, size = 0x4, offset = 0x4, fixed_abs, tag = 'smem constant byte address 0x4 - core index']
  #allocation1 [shape = 'u32[144,128]{1,0:T(1,128)}', space=vmem, size = 0x12000, scoped, tag = 'internal scratch']
  %s0 = inlined_call_operand.hbm [shape: bf16[128,128], index: 0, kind: input, shape index: {}]
  %s1 = inlined_call_operand.hbm [shape: bf16[128,256], index: 1, kind: input, shape index: {}]
  %s2 = inlined_call_operand.hbm [shape: bf16[128,128], index: 2, kind: output, shape index: {0}]
  %s3 = inlined_call_operand.hbm [shape: f32[128,128], index: 3, kind: output, shape index: {1}]
  %4 = xla_tuple %s2, %s3
  %s5 = sld [smem:[#allocation0]]
  $region34: #{tpu_custom_call.1} parent=0
    _
  %s7 = ssub.s32 1, %s5
  %s8 = scalar_select 0, %s7, %s5
  $region1: #{tpu_custom_call.1} parent=0
    #allocation2 [shape = 'u8[32768]{0}', space=vmem, size = 0x8000, scoped, tag = 'input window, operand 0, single buffered']
    #allocation3 [shape = 's32[1]{0}', space=sflag, size = 0x4, scoped, tag = 'scoped memory for tpu_custom_call.1']
    #allocation4 [shape = 's32[1]{0}', space=sflag, size = 0x4, scoped, tag = 'scoped memory for tpu_custom_call.1']
    #allocation5 [shape = 'u8[65536]{0}', space=vmem, size = 0x10000, scoped, tag = 'input window, operand 1, single buffered']
    #allocation6 [shape = 's32[1]{0}', space=sflag, size = 0x4, scoped, tag = 'scoped memory for tpu_custom_call.1']
    #allocation7 [shape = 'u8[32768]{0}', space=vmem, size = 0x8000, scoped, tag = 'output window, operand 0, single buffered']
    #allocation8 [shape = 'u8[65536]{0}', space=vmem, size = 0x10000, scoped, tag = 'output window, operand 1, single buffered']
    #allocation9 [shape = 's32[1]{0}', space=sflag, size = 0x4, scoped, tag = 'scoped memory for tpu_custom_call.1']
    %9 = vsyncpa [#allocation3], 0
    %10 = vsyncpa [#allocation6], 0
    %11 = vsyncpa [#allocation4], 0
    %12 = vsyncpa [#allocation9], 0
    // Predicated region
    $region2: #{tpu_custom_call.1} parent=1 // pred_check
      _
    $region3: #{tpu_custom_call.1} parent=1 // pred_check_branch
      %14 = sbr.rel (0) target = $region5
    $region4: #{tpu_custom_call.1} parent=1 // pred_region
      %s16 = ssub.s32 1024, 1024
      %17 = vsyncadd [#allocation3], %s16
      %s18 = sshll.u32 [#allocation2], 4
      %s19 = int_to_ptr.vmem [resolvable:$true] %s18
      %24 = dma.hbm_to_vmem [thread:$0]  %s0, 1024, %s19, [#allocation3], 64, 64, 4
    $region5: #{tpu_custom_call.1} parent=1 // pred_fallthru
      _
    // Predicated region
    $region6: #{tpu_custom_call.1} parent=1 // pred_check
      _
    $region7: #{tpu_custom_call.1} parent=1 // pred_check_branch
      %26 = sbr.rel (0) target = $region9
    $region8: #{tpu_custom_call.1} parent=1 // pred_region
      %s28 = ssub.s32 2048, 2048
      %29 = vsyncadd [#allocation6], %s28
      %s30 = sshll.u32 [#allocation5], 4
      %s31 = int_to_ptr.vmem [resolvable:$true] %s30
      %36 = dma.hbm_to_vmem [thread:$0]  %s1, 2048, %s31, [#allocation6], 128, 128, 8
    $region9: #{tpu_custom_call.1} parent=1 // pred_fallthru
      _
    // Predicated region
    $region10: #{tpu_custom_call.1} parent=1 // pred_check
      _
    $region11: #{tpu_custom_call.1} parent=1 // pred_check_branch
      %38 = sbr.rel (0) target = $region13
    $region12: #{tpu_custom_call.1} parent=1 // pred_region
      %39 = dma.done [#allocation3], 1024
    $region13: #{tpu_custom_call.1} parent=1 // pred_fallthru
      _
    // Predicated region
    $region14: #{tpu_custom_call.1} parent=1 // pred_check
      _
    $region15: #{tpu_custom_call.1} parent=1 // pred_check_branch
      %41 = sbr.rel (0) target = $region17
    $region16: #{tpu_custom_call.1} parent=1 // pred_region
      %42 = dma.done [#allocation6], 2048
    $region17: #{tpu_custom_call.1} parent=1 // pred_fallthru
      _
    %v44 = vld [vmem:[#allocation2] sm:$0xf]
    %v45 = vld [vmem:[#allocation2 + $0x4] sm:$0xf]
    %v46 = vld [vmem:[#allocation2 + $0x8] sm:$0xf]
    %v47 = vld [vmem:[#allocation2 + $0xc] sm:$0xf]
    %v48 = vld [vmem:[#allocation2 + $0x10] sm:$0xf]
    %v49 = vld [vmem:[#allocation2 + $0x14] sm:$0xf]
    %v50 = vld [vmem:[#allocation2 + $0x18] sm:$0xf]
    %v51 = vld [vmem:[#allocation2 + $0x1c] sm:$0xf]
    %v52 = vld [vmem:[#allocation2 + $0x20] sm:$0xf]
    %v53 = vld [vmem:[#allocation2 + $0x24] sm:$0xf]
    %v54 = vld [vmem:[#allocation2 + $0x28] sm:$0xf]
    %v55 = vld [vmem:[#allocation2 + $0x2c] sm:$0xf]
    %v56 = vld [vmem:[#allocation2 + $0x30] sm:$0xf]
    %v57 = vld [vmem:[#allocation2 + $0x34] sm:$0xf]
    %v58 = vld [vmem:[#allocation2 + $0x38] sm:$0xf]
    %v59 = vld [vmem:[#allocation2 + $0x3c] sm:$0xf]
    %v60 = vld [vmem:[#allocation5] sm:$0xff]
    %v61 = vld [vmem:[#allocation5 + $0x8] sm:$0xff]
    %v62 = vld [vmem:[#allocation5 + $0x10] sm:$0xff]
    %v63 = vld [vmem:[#allocation5 + $0x18] sm:$0xff]
    %v64 = vld [vmem:[#allocation5 + $0x20] sm:$0xff]
    %v65 = vld [vmem:[#allocation5 + $0x28] sm:$0xff]
    %v66 = vld [vmem:[#allocation5 + $0x30] sm:$0xff]
    %v67 = vld [vmem:[#allocation5 + $0x38] sm:$0xff]
    %v68 = vld [vmem:[#allocation5 + $0x40] sm:$0xff]
    %v69 = vld [vmem:[#allocation5 + $0x48] sm:$0xff]
    %v70 = vld [vmem:[#allocation5 + $0x50] sm:$0xff]
    %v71 = vld [vmem:[#allocation5 + $0x58] sm:$0xff]
    %v72 = vld [vmem:[#allocation5 + $0x60] sm:$0xff]
    %v73 = vld [vmem:[#allocation5 + $0x68] sm:$0xff]
    %v74 = vld [vmem:[#allocation5 + $0x70] sm:$0xff]
    %v75 = vld [vmem:[#allocation5 + $0x78] sm:$0xff]
    %v92 = vunpack.c.l.b16 %v44
    %v93 = vunpack.c.l.b16 %v45
    %v94 = vunpack.c.l.b16 %v46
    %v95 = vunpack.c.l.b16 %v47
    %v96 = vunpack.c.l.b16 %v48
    %v97 = vunpack.c.l.b16 %v49
    %v98 = vunpack.c.l.b16 %v50
    %v99 = vunpack.c.l.b16 %v51
    %v100 = vunpack.c.l.b16 %v52
    %v101 = vunpack.c.l.b16 %v53
    %v102 = vunpack.c.l.b16 %v54
    %v103 = vunpack.c.l.b16 %v55
    %v104 = vunpack.c.l.b16 %v56
    %v105 = vunpack.c.l.b16 %v57
    %v106 = vunpack.c.l.b16 %v58
    %v107 = vunpack.c.l.b16 %v59
    %v108 = vpack.c.b16 %v93, %v92
    %v109 = vpack.c.b16 %v95, %v94
    %v110 = vpack.c.b16 %v97, %v96
    %v111 = vpack.c.b16 %v99, %v98
    %v112 = vpack.c.b16 %v101, %v100
    %v113 = vpack.c.b16 %v103, %v102
    %v114 = vpack.c.b16 %v105, %v104
    %v115 = vpack.c.b16 %v107, %v106
    %v140 = vunpack.c.l.b16 %v60
    %v141 = vunpack.c.h.b16 %v60
    %v142 = vunpack.c.l.b16 %v61
    %v143 = vunpack.c.h.b16 %v61
    %v144 = vunpack.c.l.b16 %v62
    %v145 = vunpack.c.h.b16 %v62
    %v146 = vunpack.c.l.b16 %v63
    %v147 = vunpack.c.h.b16 %v63
    %v148 = vunpack.c.l.b16 %v64
    %v149 = vunpack.c.h.b16 %v64
    %v150 = vunpack.c.l.b16 %v65
    %v151 = vunpack.c.h.b16 %v65
    %v152 = vunpack.c.l.b16 %v66
    %v153 = vunpack.c.h.b16 %v66
    %v154 = vunpack.c.l.b16 %v67
    %v155 = vunpack.c.h.b16 %v67
    %v156 = vunpack.c.l.b16 %v68
    %v157 = vunpack.c.h.b16 %v68
    %v158 = vunpack.c.l.b16 %v69
    %v159 = vunpack.c.h.b16 %v69
    %v160 = vunpack.c.l.b16 %v70
    %v161 = vunpack.c.h.b16 %v70
    %v162 = vunpack.c.l.b16 %v71
    %v163 = vunpack.c.h.b16 %v71
    %v164 = vunpack.c.l.b16 %v72
    %v165 = vunpack.c.h.b16 %v72
    %v166 = vunpack.c.l.b16 %v73
    %v167 = vunpack.c.h.b16 %v73
    %v168 = vunpack.c.l.b16 %v74
    %v169 = vunpack.c.h.b16 %v74
    %v170 = vunpack.c.l.b16 %v75
    %v171 = vunpack.c.h.b16 %v75
    %v172 = vpack.c.b16 %v142, %v140
    %v173 = vpack.c.b16 %v143, %v141
    %v174 = vpack.c.b16 %v146, %v144
    %v175 = vpack.c.b16 %v147, %v145
    %v176 = vpack.c.b16 %v150, %v148
    %v177 = vpack.c.b16 %v151, %v149
    %v178 = vpack.c.b16 %v154, %v152
    %v179 = vpack.c.b16 %v155, %v153
    %v180 = vpack.c.b16 %v158, %v156
    %v181 = vpack.c.b16 %v159, %v157
    %v182 = vpack.c.b16 %v162, %v160
    %v183 = vpack.c.b16 %v163, %v161
    %v184 = vpack.c.b16 %v166, %v164
    %v185 = vpack.c.b16 %v167, %v165
    %v186 = vpack.c.b16 %v170, %v168
    %v187 = vpack.c.b16 %v171, %v169
    %204 = vmatprep.subr.bf16.mxu0 %v173
    %205 = vmatpush1.bf16.msra.mxu0 %v172
    %206 = vmatprep.subr.bf16.mxu0 %v175
    %207 = vmatpush1.bf16.msra.mxu0 %v174
    %208 = vmatprep.subr.bf16.mxu0 %v177
    %209 = vmatpush1.bf16.msra.mxu0 %v176
    %210 = vmatprep.subr.bf16.mxu0 %v179
    %211 = vmatpush1.bf16.msra.mxu0 %v178
    %212 = vmatprep.subr.bf16.mxu0 %v181
    %213 = vmatpush1.bf16.msra.mxu0 %v180
    %214 = vmatprep.subr.bf16.mxu0 %v183
    %215 = vmatpush1.bf16.msra.mxu0 %v182
    %216 = vmatprep.subr.bf16.mxu0 %v185
    %217 = vmatpush1.bf16.msra.mxu0 %v184
    %218 = vmatprep.subr.bf16.mxu0 %v187
    %219 = vmatpush1.bf16.msra.mxu0 %v186
    %220 = vmatprep.subr.bf16.mxu0 0
    %221 = vmatpush1.bf16.msra.mxu0 0
    %222 = vmatprep.subr.bf16.mxu0 0
    %223 = vmatpush1.bf16.msra.mxu0 0
    %224 = vmatprep.subr.bf16.mxu0 0
    %225 = vmatpush1.bf16.msra.mxu0 0
    %226 = vmatprep.subr.bf16.mxu0 0
    %227 = vmatpush1.bf16.msra.mxu0 0
    %228 = vmatprep.subr.bf16.mxu0 0
    %229 = vmatpush1.bf16.msra.mxu0 0
    %230 = vmatprep.subr.bf16.mxu0 0
    %231 = vmatpush1.bf16.msra.mxu0 0
    %232 = vmatprep.subr.bf16.mxu0 0
    %233 = vmatpush1.bf16.msra.mxu0 0
    %234 = vmatprep.subr.bf16.mxu0 0
    %235 = vmatpush1.bf16.msra.mxu0 0
    %236 = vmatprep.mubr.bf16.mxu0 0
    %237 = vmatmul.mubr.bf16.gmra.mrb[0].mxu0 %v108
    %v238 = vpop.f32.mrb[0].mxu0
    %v239 = vadd.f32 0.0, %v238
    %v240 = vpop.f32.mrb[0].mxu0
    %v241 = vadd.f32 0.0, %v240
    %v242 = vpop.f32.mrb[0].mxu0
    %v243 = vadd.f32 0.0, %v242
    %v244 = vpop.f32.mrb[0].mxu0
    %v245 = vadd.f32 0.0, %v244
    %246 = vmatprep.mubr.bf16.mxu0 0
    %247 = vmatmul.mubr.bf16.gmra.mrb[0].mxu0 %v109
    %v248 = vpop.f32.mrb[0].mxu0
    %v249 = vadd.f32 0.0, %v248
    %v250 = vpop.f32.mrb[0].mxu0
    %v251 = vadd.f32 0.0, %v250
    %v252 = vpop.f32.mrb[0].mxu0
    %v253 = vadd.f32 0.0, %v252
    %v254 = vpop.f32.mrb[0].mxu0
    %v255 = vadd.f32 0.0, %v254
    %256 = vmatprep.mubr.bf16.mxu0 0
    %257 = vmatmul.mubr.bf16.gmra.mrb[0].mxu0 %v110
    %v258 = vpop.f32.mrb[0].mxu0
    %v259 = vadd.f32 0.0, %v258
    %v260 = vpop.f32.mrb[0].mxu0
    %v261 = vadd.f32 0.0, %v260
    %v262 = vpop.f32.mrb[0].mxu0
    %v263 = vadd.f32 0.0, %v262
    %v264 = vpop.f32.mrb[0].mxu0
    %v265 = vadd.f32 0.0, %v264
    %266 = vmatprep.mubr.bf16.mxu0 0
    %267 = vmatmul.mubr.bf16.gmra.mrb[0].mxu0 %v111
    %v268 = vpop.f32.mrb[0].mxu0
    %v269 = vadd.f32 0.0, %v268
    %v270 = vpop.f32.mrb[0].mxu0
    %v271 = vadd.f32 0.0, %v270
    %v272 = vpop.f32.mrb[0].mxu0
    %v273 = vadd.f32 0.0, %v272
    %v274 = vpop.f32.mrb[0].mxu0
    %v275 = vadd.f32 0.0, %v274
    %276 = vmatprep.mubr.bf16.mxu0 0
    %277 = vmatmul.mubr.bf16.gmra.mrb[0].mxu0 %v112
    %v278 = vpop.f32.mrb[0].mxu0
    %v279 = vadd.f32 0.0, %v278
    %v280 = vpop.f32.mrb[0].mxu0
    %v281 = vadd.f32 0.0, %v280
    %v282 = vpop.f32.mrb[0].mxu0
    %v283 = vadd.f32 0.0, %v282
    %v284 = vpop.f32.mrb[0].mxu0
    %v285 = vadd.f32 0.0, %v284
    %286 = vmatprep.mubr.bf16.mxu0 0
    %287 = vmatmul.mubr.bf16.gmra.mrb[0].mxu0 %v113
    %v288 = vpop.f32.mrb[0].mxu0
    %v289 = vadd.f32 0.0, %v288
    %v290 = vpop.f32.mrb[0].mxu0
    %v291 = vadd.f32 0.0, %v290
    %v292 = vpop.f32.mrb[0].mxu0
    %v293 = vadd.f32 0.0, %v292
    %v294 = vpop.f32.mrb[0].mxu0
    %v295 = vadd.f32 0.0, %v294
    %296 = vmatprep.mubr.bf16.mxu0 0
    %297 = vmatmul.mubr.bf16.gmra.mrb[0].mxu0 %v114
    %v298 = vpop.f32.mrb[0].mxu0
    %v299 = vadd.f32 0.0, %v298
    %v300 = vpop.f32.mrb[0].mxu0
    %v301 = vadd.f32 0.0, %v300
    %v302 = vpop.f32.mrb[0].mxu0
    %v303 = vadd.f32 0.0, %v302
    %v304 = vpop.f32.mrb[0].mxu0
    %v305 = vadd.f32 0.0, %v304
    %306 = vmatprep.mubr.bf16.mxu0 0
    %307 = vmatmul.mubr.bf16.gmra.mrb[0].mxu0 %v115
    %v308 = vpop.f32.mrb[0].mxu0
    %v309 = vadd.f32 0.0, %v308
    %v310 = vpop.f32.mrb[0].mxu0
    %v311 = vadd.f32 0.0, %v310
    %v312 = vpop.f32.mrb[0].mxu0
    %v313 = vadd.f32 0.0, %v312
    %v314 = vpop.f32.mrb[0].mxu0
    %v315 = vadd.f32 0.0, %v314
    %316 = vdwg.mxu0
    %v317 = vpack.c.bf16 %v243, %v239
    %v318 = vpack.c.bf16 %v253, %v249
    %v319 = vpack.c.bf16 %v263, %v259
    %v320 = vpack.c.bf16 %v273, %v269
    %v321 = vpack.c.bf16 %v283, %v279
    %v322 = vpack.c.bf16 %v293, %v289
    %v323 = vpack.c.bf16 %v303, %v299
    %v324 = vpack.c.bf16 %v313, %v309
    %v333 = vunpack.c.l.b16 %v317
    %v334 = vunpack.c.h.b16 %v317
    %v335 = vunpack.c.l.b16 %v318
    %v336 = vunpack.c.h.b16 %v318
    %v337 = vunpack.c.l.b16 %v319
    %v338 = vunpack.c.h.b16 %v319
    %v339 = vunpack.c.l.b16 %v320
    %v340 = vunpack.c.h.b16 %v320
    %v341 = vunpack.c.l.b16 %v321
    %v342 = vunpack.c.h.b16 %v321
    %v343 = vunpack.c.l.b16 %v322
    %v344 = vunpack.c.h.b16 %v322
    %v345 = vunpack.c.l.b16 %v323
    %v346 = vunpack.c.h.b16 %v323
    %v347 = vunpack.c.l.b16 %v324
    %v348 = vunpack.c.h.b16 %v324
    %v349 = vpack.c.b16 %v333, %v333
    %v350 = vpack.c.b16 %v334, %v334
    %v351 = vpack.c.b16 %v335, %v335
    %v352 = vpack.c.b16 %v336, %v336
    %v353 = vpack.c.b16 %v337, %v337
    %v354 = vpack.c.b16 %v338, %v338
    %v355 = vpack.c.b16 %v339, %v339
    %v356 = vpack.c.b16 %v340, %v340
    %v357 = vpack.c.b16 %v341, %v341
    %v358 = vpack.c.b16 %v342, %v342
    %v359 = vpack.c.b16 %v343, %v343
    %v360 = vpack.c.b16 %v344, %v344
    %v361 = vpack.c.b16 %v345, %v345
    %v362 = vpack.c.b16 %v346, %v346
    %v363 = vpack.c.b16 %v347, %v347
    %v364 = vpack.c.b16 %v348, %v348
    %381 = vst [vmem:[#allocation7] sm:$0xf] %v349
    %382 = vst [vmem:[#allocation7 + $0x4] sm:$0xf] %v350
    %383 = vst [vmem:[#allocation7 + $0x8] sm:$0xf] %v351
    %384 = vst [vmem:[#allocation7 + $0xc] sm:$0xf] %v352
    %385 = vst [vmem:[#allocation7 + $0x10] sm:$0xf] %v353
    %386 = vst [vmem:[#allocation7 + $0x14] sm:$0xf] %v354
    %387 = vst [vmem:[#allocation7 + $0x18] sm:$0xf] %v355
    %388 = vst [vmem:[#allocation7 + $0x1c] sm:$0xf] %v356
    %389 = vst [vmem:[#allocation7 + $0x20] sm:$0xf] %v357
    %390 = vst [vmem:[#allocation7 + $0x24] sm:$0xf] %v358
    %391 = vst [vmem:[#allocation7 + $0x28] sm:$0xf] %v359
    %392 = vst [vmem:[#allocation7 + $0x2c] sm:$0xf] %v360
    %393 = vst [vmem:[#allocation7 + $0x30] sm:$0xf] %v361
    %394 = vst [vmem:[#allocation7 + $0x34] sm:$0xf] %v362
    %395 = vst [vmem:[#allocation7 + $0x38] sm:$0xf] %v363
    %396 = vst [vmem:[#allocation7 + $0x3c] sm:$0xf] %v364
    %397 = vst [vmem:[#allocation8] sm:$0xff] %v241
    %398 = vst [vmem:[#allocation8 + $0x8] sm:$0xff] %v245
    %399 = vst [vmem:[#allocation8 + $0x10] sm:$0xff] %v251
    %400 = vst [vmem:[#allocation8 + $0x18] sm:$0xff] %v255
    %401 = vst [vmem:[#allocation8 + $0x20] sm:$0xff] %v261
    %402 = vst [vmem:[#allocation8 + $0x28] sm:$0xff] %v265
    %403 = vst [vmem:[#allocation8 + $0x30] sm:$0xff] %v271
    %404 = vst [vmem:[#allocation8 + $0x38] sm:$0xff] %v275
    %405 = vst [vmem:[#allocation8 + $0x40] sm:$0xff] %v281
    %406 = vst [vmem:[#allocation8 + $0x48] sm:$0xff] %v285
    %407 = vst [vmem:[#allocation8 + $0x50] sm:$0xff] %v291
    %408 = vst [vmem:[#allocation8 + $0x58] sm:$0xff] %v295
    %409 = vst [vmem:[#allocation8 + $0x60] sm:$0xff] %v301
    %410 = vst [vmem:[#allocation8 + $0x68] sm:$0xff] %v305
    %411 = vst [vmem:[#allocation8 + $0x70] sm:$0xff] %v311
    %412 = vst [vmem:[#allocation8 + $0x78] sm:$0xff] %v315
    // Predicated region
    $region18: #{tpu_custom_call.1} parent=1 // pred_check
      _
    $region19: #{tpu_custom_call.1} parent=1 // pred_check_branch
      %414 = sbr.rel (0) target = $region21
    $region20: #{tpu_custom_call.1} parent=1 // pred_region
      %s416 = ssub.s32 1024, 1024
      %417 = vsyncadd [#allocation4], %s416
      %s418 = sshll.u32 [#allocation7], 4
      %s419 = int_to_ptr.vmem [resolvable:$true] %s418
      %424 = dma.vmem_to_hbm [thread:$0]  %s419, 1024, %s2, [#allocation4], 64, 64, 4
    $region21: #{tpu_custom_call.1} parent=1 // pred_fallthru
      _
    // Predicated region
    $region22: #{tpu_custom_call.1} parent=1 // pred_check
      _
    $region23: #{tpu_custom_call.1} parent=1 // pred_check_branch
      %426 = sbr.rel (0) target = $region25
    $region24: #{tpu_custom_call.1} parent=1 // pred_region
      %s428 = ssub.s32 2048, 2048
      %429 = vsyncadd [#allocation9], %s428
      %s430 = sshll.u32 [#allocation8], 4
      %s431 = int_to_ptr.vmem [resolvable:$true] %s430
      %436 = dma.vmem_to_hbm [thread:$0]  %s431, 2048, %s3, [#allocation9], 128, 128, 8
    $region25: #{tpu_custom_call.1} parent=1 // pred_fallthru
      _
    // Predicated region
    $region26: #{tpu_custom_call.1} parent=1 // pred_check
      _
    $region27: #{tpu_custom_call.1} parent=1 // pred_check_branch
      %438 = sbr.rel (0) target = $region29
    $region28: #{tpu_custom_call.1} parent=1 // pred_region
      %439 = dma.done [#allocation4], 1024
    $region29: #{tpu_custom_call.1} parent=1 // pred_fallthru
      _
    // Predicated region
    $region30: #{tpu_custom_call.1} parent=1 // pred_check
      _
    $region31: #{tpu_custom_call.1} parent=1 // pred_check_branch
      %441 = sbr.rel (0) target = $region33
    $region32: #{tpu_custom_call.1} parent=1 // pred_region
      %442 = dma.done [#allocation9], 2048
    $region33: #{tpu_custom_call.1} parent=1 // pred_fallthru
      _
    %443 = vsyncpa [#allocation3], 1
    %444 = vsyncpa [#allocation6], 1
    %445 = vsyncpa [#allocation4], 1
    %446 = vsyncpa [#allocation9], 1

</llo_original>
